<compile_context>
chip_gen: v7x
topology: tpu7x:2x2x1
jax: 0.10.0
libtpu: 0.0.40
codegen_flags: <defaults>
</compile_context>

<pallas_src>
import jax
import jax.numpy as jnp
from jax.experimental import pallas as pl
from jax.experimental.pallas import tpu as pltpu

LANES = 128  # lane-dense width; all hidden dims are zero-padded to this


def autoencoder_kernel(x_ref, wpack_ref, vpack_ref, o_ref):
    # vpack rows: 0=b1 1=g1 2=be1 3=b2 4=g2 5=be2 6=b3 7=g3 8=be3 9=b4
    eps = jnp.float32(1e-5)
    inv_b = jnp.float32(1.0 / x_ref.shape[0])

    def relu_bn(h, g_row, be_row):
        # ReLU then BatchNorm1d (training mode), folded into one scale/shift.
        h = jnp.maximum(h, 0.0)
        mu = jnp.sum(h, axis=0, keepdims=True) * inv_b            # (1, 128)
        var = jnp.sum(h * h, axis=0, keepdims=True) * inv_b - mu * mu
        s = g_row * jax.lax.rsqrt(var + eps)                      # EUP rsqrt
        t = be_row - mu * s
        return h * s + t                                          # padded cols stay 0

    x = x_ref[...]                                                # (B, 128)

    # encoder: Linear -> ReLU -> BN, twice
    h = jnp.dot(x, wpack_ref[0], preferred_element_type=jnp.float32) + vpack_ref[0:1, :]
    h = relu_bn(h, vpack_ref[1:2, :], vpack_ref[2:3, :])

    h = jnp.dot(h, wpack_ref[1], preferred_element_type=jnp.float32) + vpack_ref[3:4, :]
    h = relu_bn(h, vpack_ref[4:5, :], vpack_ref[5:6, :])

    # decoder: Linear -> ReLU -> BN, then final Linear
    h = jnp.dot(h, wpack_ref[2], preferred_element_type=jnp.float32) + vpack_ref[6:7, :]
    h = relu_bn(h, vpack_ref[7:8, :], vpack_ref[8:9, :])

    out = jnp.dot(h, wpack_ref[3], preferred_element_type=jnp.float32) + vpack_ref[9:10, :]
    o_ref[...] = out.astype(o_ref.dtype)


def autoencoder_forward(x, wpack, vpack):
    """x: (B, 1, D) float32 with D == 128, B a multiple of 8. Returns (B, 1, D)."""
    B, C, D = x.shape
    assert C == 1 and D == LANES
    x2d = x.reshape(B, D)  # squeeze(1)

    # Padded matmul work actually executed (4 matmuls at 128x128).
    flops = 4 * 2 * B * LANES * LANES
    transcendentals = 3 * LANES                                   # 3 rsqrt rows
    bytes_accessed = 4 * (x2d.size + wpack.size + vpack.size + B * D)

    vmem = pl.BlockSpec(memory_space=pltpu.MemorySpace.VMEM)
    out2d = pl.pallas_call(
        autoencoder_kernel,
        out_shape=jax.ShapeDtypeStruct((B, D), jnp.float32),
        in_specs=[vmem, vmem, vmem],
        out_specs=vmem,
        cost_estimate=pl.CostEstimate(
            flops=flops,
            transcendentals=transcendentals,
            bytes_accessed=bytes_accessed),
    )(x2d, wpack, vpack)

    return out2d.reshape(B, 1, D)  # unsqueeze(1)


def init_params(key, dim):
    """Parameter init matching the nn.Module shapes.
    PyTorch Linear weights are (out, in); we store them transposed (in, out)."""
    d2, d4 = dim // 2, dim // 4
    keys = jax.random.split(key, 8)

    def linear(kw, kb, fan_in, fan_out):
        bound = 1.0 / jnp.sqrt(fan_in)
        w = jax.random.uniform(kw, (fan_in, fan_out), jnp.float32, -bound, bound)
        b = jax.random.uniform(kb, (1, fan_out), jnp.float32, -bound, bound)
        return w, b

    w1, b1 = linear(keys[0], keys[1], dim, d2)
    w2, b2 = linear(keys[2], keys[3], d2, d4)
    w3, b3 = linear(keys[4], keys[5], d4, d2)
    w4, b4 = linear(keys[6], keys[7], d2, dim)

    return dict(
        w1=w1, b1=b1, g1=jnp.ones((1, d2), jnp.float32), be1=jnp.zeros((1, d2), jnp.float32),
        w2=w2, b2=b2, g2=jnp.ones((1, d4), jnp.float32), be2=jnp.zeros((1, d4), jnp.float32),
        w3=w3, b3=b3, g3=jnp.ones((1, d2), jnp.float32), be3=jnp.zeros((1, d2), jnp.float32),
        w4=w4, b4=b4,
    )


def pack_params(params):
    """Pack 4 weights into (4,128,128) and 10 vectors into (10,128), zero-padded."""
    def padw(w):
        i, o = w.shape
        return jnp.zeros((LANES, LANES), jnp.float32).at[:i, :o].set(w)

    def padv(v):
        v = v.reshape(-1)
        return jnp.zeros((LANES,), jnp.float32).at[: v.shape[0]].set(v)

    wpack = jnp.stack([padw(params["w1"]), padw(params["w2"]),
                       padw(params["w3"]), padw(params["w4"])])
    vpack = jnp.stack([padv(params["b1"]), padv(params["g1"]), padv(params["be1"]),
                       padv(params["b2"]), padv(params["g2"]), padv(params["be2"]),
                       padv(params["b3"]), padv(params["g3"]), padv(params["be3"]),
                       padv(params["b4"])])
    return wpack, vpack


def reference_forward(x, params):
    """Pure-JAX reference with identical semantics (for verification)."""
    eps = 1e-5

    def bn(h, g, b):
        mu = jnp.mean(h, axis=0, keepdims=True)
        var = jnp.mean((h - mu) ** 2, axis=0, keepdims=True)
        return (h - mu) / jnp.sqrt(var + eps) * g + b

    h = x.reshape(x.shape[0], x.shape[2])
    h = bn(jnp.maximum(h @ params["w1"] + params["b1"], 0.0), params["g1"], params["be1"])
    h = bn(jnp.maximum(h @ params["w2"] + params["b2"], 0.0), params["g2"], params["be2"])
    h = bn(jnp.maximum(h @ params["w3"] + params["b3"], 0.0), params["g3"], params["be3"])
    h = h @ params["w4"] + params["b4"]
    return h[:, None, :]


if __name__ == "__main__":
    dim = 128       # dim // 2 = 64, dim // 4 = 32
    batch = 8
    key = jax.random.PRNGKey(0)
    kx, kp = jax.random.split(key)

    x = jax.random.normal(kx, (batch, 1, dim), dtype=jnp.float32)
    params = init_params(kp, dim)
    wpack, vpack = pack_params(params)

    out = autoencoder_forward(x, wpack, vpack)
    out = jax.block_until_ready(out)

    ref = reference_forward(x, params)
    assert out.shape == (batch, 1, dim)
    assert jnp.allclose(out, ref, atol=1e-4, rtol=1e-4), "mismatch vs reference"

    print("KERNEL_OK")
</pallas_src>

<mosaic_0001>
module attributes {stable_mosaic.version = 11 : i64} {
  func.func @autoencoder_kernel(%arg0: memref<8x128xf32, #tpu.memory_space<vmem>>, %arg1: memref<4x128x128xf32, #tpu.memory_space<vmem>>, %arg2: memref<10x128xf32, #tpu.memory_space<vmem>>, %arg3: memref<8x128xf32, #tpu.memory_space<vmem>>) attributes {dimension_semantics = [], scalar_prefetch = 0 : i64, scratch_operands = 0 : i64, tpu.core_type = #tpu.core_type<tc>} {
    %c0 = arith.constant 0 : index
    %c0_0 = arith.constant 0 : index
    %0 = vector.load %arg0[%c0, %c0_0] : memref<8x128xf32, #tpu.memory_space<vmem>>, vector<8x128xf32>
    %c0_1 = arith.constant 0 : index
    %c0_2 = arith.constant 0 : index
    %c0_3 = arith.constant 0 : index
    %1 = vector.load %arg1[%c0_1, %c0_2, %c0_3] : memref<4x128x128xf32, #tpu.memory_space<vmem>>, vector<1x128x128xf32>
    %2 = vector.shape_cast %1 : vector<1x128x128xf32> to vector<128x128xf32>
    %cst = arith.constant dense<0.000000e+00> : vector<8x128xf32>
    %3 = tpu.matmul %0, %2, %cst {dimension_numbers = #tpu.dot_dimension_numbers<[1], [0], [0], [1], [0, 0, 1, 1], [], []>} : vector<8x128xf32>, vector<128x128xf32>, vector<8x128xf32> -> vector<8x128xf32>
    %c0_4 = arith.constant 0 : index
    %c0_5 = arith.constant 0 : index
    %4 = vector.load %arg2[%c0_4, %c0_5] : memref<10x128xf32, #tpu.memory_space<vmem>>, vector<1x128xf32>
    %5 = vector.broadcast %4 : vector<1x128xf32> to vector<8x128xf32>
    %6 = arith.addf %3, %5 : vector<8x128xf32>
    %c1 = arith.constant 1 : index
    %c0_6 = arith.constant 0 : index
    %7 = vector.load %arg2[%c1, %c0_6] : memref<10x128xf32, #tpu.memory_space<vmem>>, vector<1x128xf32>
    %c2 = arith.constant 2 : index
    %c0_7 = arith.constant 0 : index
    %8 = vector.load %arg2[%c2, %c0_7] : memref<10x128xf32, #tpu.memory_space<vmem>>, vector<1x128xf32>
    %cst_8 = arith.constant 0.000000e+00 : f32
    %9 = vector.broadcast %cst_8 : f32 to vector<8x128xf32>
    %10 = arith.maximumf %6, %9 : vector<8x128xf32>
    %cst_9 = arith.constant dense<0.000000e+00> : vector<128xf32>
    %11 = vector.multi_reduction <add>, %10, %cst_9 [0] : vector<8x128xf32> to vector<128xf32>
    %12 = vector.shape_cast %11 : vector<128xf32> to vector<1x128xf32>
    %cst_10 = arith.constant 1.250000e-01 : f32
    %13 = vector.broadcast %cst_10 : f32 to vector<1x128xf32>
    %14 = arith.mulf %12, %13 : vector<1x128xf32>
    %15 = arith.mulf %10, %10 : vector<8x128xf32>
    %cst_11 = arith.constant dense<0.000000e+00> : vector<128xf32>
    %16 = vector.multi_reduction <add>, %15, %cst_11 [0] : vector<8x128xf32> to vector<128xf32>
    %17 = vector.shape_cast %16 : vector<128xf32> to vector<1x128xf32>
    %cst_12 = arith.constant 1.250000e-01 : f32
    %18 = vector.broadcast %cst_12 : f32 to vector<1x128xf32>
    %19 = arith.mulf %17, %18 : vector<1x128xf32>
    %20 = arith.mulf %14, %14 : vector<1x128xf32>
    %21 = arith.subf %19, %20 : vector<1x128xf32>
    %cst_13 = arith.constant 9.99999974E-6 : f32
    %22 = vector.broadcast %cst_13 : f32 to vector<1x128xf32>
    %23 = arith.addf %21, %22 : vector<1x128xf32>
    %24 = math.rsqrt %23 : vector<1x128xf32>
    %25 = arith.mulf %7, %24 : vector<1x128xf32>
    %26 = arith.mulf %14, %25 : vector<1x128xf32>
    %27 = arith.subf %8, %26 : vector<1x128xf32>
    %28 = vector.broadcast %25 : vector<1x128xf32> to vector<8x128xf32>
    %29 = arith.mulf %10, %28 : vector<8x128xf32>
    %30 = vector.broadcast %27 : vector<1x128xf32> to vector<8x128xf32>
    %31 = arith.addf %29, %30 : vector<8x128xf32>
    %c1_14 = arith.constant 1 : index
    %c0_15 = arith.constant 0 : index
    %c0_16 = arith.constant 0 : index
    %32 = vector.load %arg1[%c1_14, %c0_15, %c0_16] : memref<4x128x128xf32, #tpu.memory_space<vmem>>, vector<1x128x128xf32>
    %33 = vector.shape_cast %32 : vector<1x128x128xf32> to vector<128x128xf32>
    %cst_17 = arith.constant dense<0.000000e+00> : vector<8x128xf32>
    %34 = tpu.matmul %31, %33, %cst_17 {dimension_numbers = #tpu.dot_dimension_numbers<[1], [0], [0], [1], [0, 0, 1, 1], [], []>} : vector<8x128xf32>, vector<128x128xf32>, vector<8x128xf32> -> vector<8x128xf32>
    %c3 = arith.constant 3 : index
    %c0_18 = arith.constant 0 : index
    %35 = vector.load %arg2[%c3, %c0_18] : memref<10x128xf32, #tpu.memory_space<vmem>>, vector<1x128xf32>
    %36 = vector.broadcast %35 : vector<1x128xf32> to vector<8x128xf32>
    %37 = arith.addf %34, %36 : vector<8x128xf32>
    %c4 = arith.constant 4 : index
    %c0_19 = arith.constant 0 : index
    %38 = vector.load %arg2[%c4, %c0_19] : memref<10x128xf32, #tpu.memory_space<vmem>>, vector<1x128xf32>
    %c5 = arith.constant 5 : index
    %c0_20 = arith.constant 0 : index
    %39 = vector.load %arg2[%c5, %c0_20] : memref<10x128xf32, #tpu.memory_space<vmem>>, vector<1x128xf32>
    %cst_21 = arith.constant 0.000000e+00 : f32
    %40 = vector.broadcast %cst_21 : f32 to vector<8x128xf32>
    %41 = arith.maximumf %37, %40 : vector<8x128xf32>
    %cst_22 = arith.constant dense<0.000000e+00> : vector<128xf32>
    %42 = vector.multi_reduction <add>, %41, %cst_22 [0] : vector<8x128xf32> to vector<128xf32>
    %43 = vector.shape_cast %42 : vector<128xf32> to vector<1x128xf32>
    %cst_23 = arith.constant 1.250000e-01 : f32
    %44 = vector.broadcast %cst_23 : f32 to vector<1x128xf32>
    %45 = arith.mulf %43, %44 : vector<1x128xf32>
    %46 = arith.mulf %41, %41 : vector<8x128xf32>
    %cst_24 = arith.constant dense<0.000000e+00> : vector<128xf32>
    %47 = vector.multi_reduction <add>, %46, %cst_24 [0] : vector<8x128xf32> to vector<128xf32>
    %48 = vector.shape_cast %47 : vector<128xf32> to vector<1x128xf32>
    %cst_25 = arith.constant 1.250000e-01 : f32
    %49 = vector.broadcast %cst_25 : f32 to vector<1x128xf32>
    %50 = arith.mulf %48, %49 : vector<1x128xf32>
    %51 = arith.mulf %45, %45 : vector<1x128xf32>
    %52 = arith.subf %50, %51 : vector<1x128xf32>
    %cst_26 = arith.constant 9.99999974E-6 : f32
    %53 = vector.broadcast %cst_26 : f32 to vector<1x128xf32>
    %54 = arith.addf %52, %53 : vector<1x128xf32>
    %55 = math.rsqrt %54 : vector<1x128xf32>
    %56 = arith.mulf %38, %55 : vector<1x128xf32>
    %57 = arith.mulf %45, %56 : vector<1x128xf32>
    %58 = arith.subf %39, %57 : vector<1x128xf32>
    %59 = vector.broadcast %56 : vector<1x128xf32> to vector<8x128xf32>
    %60 = arith.mulf %41, %59 : vector<8x128xf32>
    %61 = vector.broadcast %58 : vector<1x128xf32> to vector<8x128xf32>
    %62 = arith.addf %60, %61 : vector<8x128xf32>
    %c2_27 = arith.constant 2 : index
    %c0_28 = arith.constant 0 : index
    %c0_29 = arith.constant 0 : index
    %63 = vector.load %arg1[%c2_27, %c0_28, %c0_29] : memref<4x128x128xf32, #tpu.memory_space<vmem>>, vector<1x128x128xf32>
    %64 = vector.shape_cast %63 : vector<1x128x128xf32> to vector<128x128xf32>
    %cst_30 = arith.constant dense<0.000000e+00> : vector<8x128xf32>
    %65 = tpu.matmul %62, %64, %cst_30 {dimension_numbers = #tpu.dot_dimension_numbers<[1], [0], [0], [1], [0, 0, 1, 1], [], []>} : vector<8x128xf32>, vector<128x128xf32>, vector<8x128xf32> -> vector<8x128xf32>
    %c6 = arith.constant 6 : index
    %c0_31 = arith.constant 0 : index
    %66 = vector.load %arg2[%c6, %c0_31] : memref<10x128xf32, #tpu.memory_space<vmem>>, vector<1x128xf32>
    %67 = vector.broadcast %66 : vector<1x128xf32> to vector<8x128xf32>
    %68 = arith.addf %65, %67 : vector<8x128xf32>
    %c7 = arith.constant 7 : index
    %c0_32 = arith.constant 0 : index
    %69 = vector.load %arg2[%c7, %c0_32] : memref<10x128xf32, #tpu.memory_space<vmem>>, vector<1x128xf32>
    %c8 = arith.constant 8 : index
    %c0_33 = arith.constant 0 : index
    %70 = vector.load %arg2[%c8, %c0_33] : memref<10x128xf32, #tpu.memory_space<vmem>>, vector<1x128xf32>
    %cst_34 = arith.constant 0.000000e+00 : f32
    %71 = vector.broadcast %cst_34 : f32 to vector<8x128xf32>
    %72 = arith.maximumf %68, %71 : vector<8x128xf32>
    %cst_35 = arith.constant dense<0.000000e+00> : vector<128xf32>
    %73 = vector.multi_reduction <add>, %72, %cst_35 [0] : vector<8x128xf32> to vector<128xf32>
    %74 = vector.shape_cast %73 : vector<128xf32> to vector<1x128xf32>
    %cst_36 = arith.constant 1.250000e-01 : f32
    %75 = vector.broadcast %cst_36 : f32 to vector<1x128xf32>
    %76 = arith.mulf %74, %75 : vector<1x128xf32>
    %77 = arith.mulf %72, %72 : vector<8x128xf32>
    %cst_37 = arith.constant dense<0.000000e+00> : vector<128xf32>
    %78 = vector.multi_reduction <add>, %77, %cst_37 [0] : vector<8x128xf32> to vector<128xf32>
    %79 = vector.shape_cast %78 : vector<128xf32> to vector<1x128xf32>
    %cst_38 = arith.constant 1.250000e-01 : f32
    %80 = vector.broadcast %cst_38 : f32 to vector<1x128xf32>
    %81 = arith.mulf %79, %80 : vector<1x128xf32>
    %82 = arith.mulf %76, %76 : vector<1x128xf32>
    %83 = arith.subf %81, %82 : vector<1x128xf32>
    %cst_39 = arith.constant 9.99999974E-6 : f32
    %84 = vector.broadcast %cst_39 : f32 to vector<1x128xf32>
    %85 = arith.addf %83, %84 : vector<1x128xf32>
    %86 = math.rsqrt %85 : vector<1x128xf32>
    %87 = arith.mulf %69, %86 : vector<1x128xf32>
    %88 = arith.mulf %76, %87 : vector<1x128xf32>
    %89 = arith.subf %70, %88 : vector<1x128xf32>
    %90 = vector.broadcast %87 : vector<1x128xf32> to vector<8x128xf32>
    %91 = arith.mulf %72, %90 : vector<8x128xf32>
    %92 = vector.broadcast %89 : vector<1x128xf32> to vector<8x128xf32>
    %93 = arith.addf %91, %92 : vector<8x128xf32>
    %c3_40 = arith.constant 3 : index
    %c0_41 = arith.constant 0 : index
    %c0_42 = arith.constant 0 : index
    %94 = vector.load %arg1[%c3_40, %c0_41, %c0_42] : memref<4x128x128xf32, #tpu.memory_space<vmem>>, vector<1x128x128xf32>
    %95 = vector.shape_cast %94 : vector<1x128x128xf32> to vector<128x128xf32>
    %cst_43 = arith.constant dense<0.000000e+00> : vector<8x128xf32>
    %96 = tpu.matmul %93, %95, %cst_43 {dimension_numbers = #tpu.dot_dimension_numbers<[1], [0], [0], [1], [0, 0, 1, 1], [], []>} : vector<8x128xf32>, vector<128x128xf32>, vector<8x128xf32> -> vector<8x128xf32>
    %c9 = arith.constant 9 : index
    %c0_44 = arith.constant 0 : index
    %97 = vector.load %arg2[%c9, %c0_44] : memref<10x128xf32, #tpu.memory_space<vmem>>, vector<1x128xf32>
    %98 = vector.broadcast %97 : vector<1x128xf32> to vector<8x128xf32>
    %99 = arith.addf %96, %98 : vector<8x128xf32>
    %c0_45 = arith.constant 0 : index
    %c0_46 = arith.constant 0 : index
    %100 = vector.load %arg3[%c0_45, %c0_46] : memref<8x128xf32, #tpu.memory_space<vmem>>, vector<8x128xf32>
    tpu.vector_store %arg3[%c0_45, %c0_46], %99 {strides = array<i32>} : memref<8x128xf32, #tpu.memory_space<vmem>>, vector<8x128xf32>,
    return
  }
}

</mosaic_0001>

<llo_original>
// kernel: tpu_custom_call.1
$region0: #{tpu_custom_call.1}
  #allocation0 [shape = 'u32[]', space=smem, size = 0x4, offset = 0x4, fixed_abs, tag = 'smem constant byte address 0x4 - core index']
  #allocation1 [shape = 'u32[144,128]{1,0:T(1,128)}', space=vmem, size = 0x12000, scoped, tag = 'internal scratch']
  %s0 = inlined_call_operand.hbm [shape: f32[8,128], index: 0, kind: input, shape index: {}]
  %s1 = inlined_call_operand.hbm [shape: f32[4,128,128], index: 1, kind: input, shape index: {}]
  %s2 = inlined_call_operand.hbm [shape: f32[10,128], index: 2, kind: input, shape index: {}]
  %s3 = inlined_call_operand.hbm [shape: f32[8,128], index: 3, kind: output, shape index: {}]
  %s4 = sld [smem:[#allocation0]]
  $region34: #{tpu_custom_call.1} parent=0
    _
  %s6 = ssub.s32 1, %s4
  %s7 = scalar_select 0, %s6, %s4
  $region1: #{tpu_custom_call.1} parent=0
    #allocation2 [shape = 'u8[4096]{0}', space=vmem, size = 0x1000, scoped, tag = 'input window, operand 0, single buffered']
    #allocation3 [shape = 's32[1]{0}', space=sflag, size = 0x4, scoped, tag = 'scoped memory for tpu_custom_call.1']
    #allocation4 [shape = 's32[1]{0}', space=sflag, size = 0x4, scoped, tag = 'scoped memory for tpu_custom_call.1']
    #allocation5 [shape = 'u8[262144]{0}', space=vmem, size = 0x40000, scoped, tag = 'input window, operand 1, single buffered']
    #allocation6 [shape = 's32[1]{0}', space=sflag, size = 0x4, scoped, tag = 'scoped memory for tpu_custom_call.1']
    #allocation7 [shape = 'u8[8192]{0}', space=vmem, size = 0x2000, scoped, tag = 'input window, operand 2, single buffered']
    #allocation8 [shape = 'u8[4096]{0}', space=vmem, size = 0x1000, scoped, tag = 'output window, operand 0, single buffered']
    %8 = vsyncpa [#allocation3], 0
    %9 = vsyncpa [#allocation6], 0
    %10 = vsyncpa [#allocation4], 0
    // Predicated region
    $region2: #{tpu_custom_call.1} parent=1 // pred_check
      _
    $region3: #{tpu_custom_call.1} parent=1 // pred_check_branch
      %12 = sbr.rel (0) target = $region5
    $region4: #{tpu_custom_call.1} parent=1 // pred_region
      %s14 = ssub.s32 128, 128
      %15 = vsyncadd [#allocation3], %s14
      %s17 = sshll.u32 [#allocation2], 4
      %s18 = int_to_ptr.vmem [resolvable:$true] %s17
      %20 = dma.hbm_to_vmem [thread:$0]  %s0, 128, %s18, [#allocation3]
    $region5: #{tpu_custom_call.1} parent=1 // pred_fallthru
      _
    // Predicated region
    $region6: #{tpu_custom_call.1} parent=1 // pred_check
      _
    $region7: #{tpu_custom_call.1} parent=1 // pred_check_branch
      %22 = sbr.rel (0) target = $region9
    $region8: #{tpu_custom_call.1} parent=1 // pred_region
      %s24 = ssub.s32 8192, 8192
      %25 = vsyncadd [#allocation6], %s24
      %s26 = sshll.u32 [#allocation5], 4
      %s27 = int_to_ptr.vmem [resolvable:$true] %s26
      %32 = dma.hbm_to_vmem [thread:$0]  %s1, 8192, %s27, [#allocation6], 128, 128, 8
    $region9: #{tpu_custom_call.1} parent=1 // pred_fallthru
      _
    // Predicated region
    $region10: #{tpu_custom_call.1} parent=1 // pred_check
      _
    $region11: #{tpu_custom_call.1} parent=1 // pred_check_branch
      %34 = sbr.rel (0) target = $region13
    $region12: #{tpu_custom_call.1} parent=1 // pred_region
      %s36 = ssub.s32 256, 256
      %37 = vsyncadd [#allocation6], %s36
      %s38 = sshll.u32 [#allocation7], 4
      %s39 = int_to_ptr.vmem [resolvable:$true] %s38
      %44 = dma.hbm_to_vmem [thread:$0]  %s2, 256, %s39, [#allocation6], 128, 128, 8
    $region13: #{tpu_custom_call.1} parent=1 // pred_fallthru
      _
    // Predicated region
    $region14: #{tpu_custom_call.1} parent=1 // pred_check
      _
    $region15: #{tpu_custom_call.1} parent=1 // pred_check_branch
      %46 = sbr.rel (0) target = $region17
    $region16: #{tpu_custom_call.1} parent=1 // pred_region
      %47 = dma.done [#allocation3], 128
    $region17: #{tpu_custom_call.1} parent=1 // pred_fallthru
      _
    // Predicated region
    $region18: #{tpu_custom_call.1} parent=1 // pred_check
      _
    $region19: #{tpu_custom_call.1} parent=1 // pred_check_branch
      %49 = sbr.rel (0) target = $region21
    $region20: #{tpu_custom_call.1} parent=1 // pred_region
      %50 = dma.done [#allocation6], 8192
    $region21: #{tpu_custom_call.1} parent=1 // pred_fallthru
      _
    // Predicated region
    $region22: #{tpu_custom_call.1} parent=1 // pred_check
      _
    $region23: #{tpu_custom_call.1} parent=1 // pred_check_branch
      %52 = sbr.rel (0) target = $region25
    $region24: #{tpu_custom_call.1} parent=1 // pred_region
      %53 = dma.done [#allocation6], 256
    $region25: #{tpu_custom_call.1} parent=1 // pred_fallthru
      _
    %v54 = vld [vmem:[#allocation2] sm:$0xff]
    %v55 = vld [vmem:[#allocation5] sm:$0xff]
    %v56 = vld [vmem:[#allocation5 + $0x8] sm:$0xff]
    %v57 = vld [vmem:[#allocation5 + $0x10] sm:$0xff]
    %v58 = vld [vmem:[#allocation5 + $0x18] sm:$0xff]
    %v59 = vld [vmem:[#allocation5 + $0x20] sm:$0xff]
    %v60 = vld [vmem:[#allocation5 + $0x28] sm:$0xff]
    %v61 = vld [vmem:[#allocation5 + $0x30] sm:$0xff]
    %v62 = vld [vmem:[#allocation5 + $0x38] sm:$0xff]
    %v63 = vld [vmem:[#allocation5 + $0x40] sm:$0xff]
    %v64 = vld [vmem:[#allocation5 + $0x48] sm:$0xff]
    %v65 = vld [vmem:[#allocation5 + $0x50] sm:$0xff]
    %v66 = vld [vmem:[#allocation5 + $0x58] sm:$0xff]
    %v67 = vld [vmem:[#allocation5 + $0x60] sm:$0xff]
    %v68 = vld [vmem:[#allocation5 + $0x68] sm:$0xff]
    %v69 = vld [vmem:[#allocation5 + $0x70] sm:$0xff]
    %v70 = vld [vmem:[#allocation5 + $0x78] sm:$0xff]
    %v71 = vld [vmem:[#allocation7] sm:$0x1]
    %v72 = vlaneseq
    %v73 = vshrl.u32 %v72, 7
    %v74 = vsub.s32 0, %v73
    %v75 = vrot.slane %v71, %v74
    %76 = vmatprep.subr.mxu0 0.0
    %77 = vmatpush1.msra.mxu0 %v55
    %78 = vmatprep.subr.mxu0 0.0
    %79 = vmatpush1.msra.mxu0 %v56
    %80 = vmatprep.subr.mxu0 0.0
    %81 = vmatpush1.msra.mxu0 %v57
    %82 = vmatprep.subr.mxu0 0.0
    %83 = vmatpush1.msra.mxu0 %v58
    %84 = vmatprep.subr.mxu0 0.0
    %85 = vmatpush1.msra.mxu0 %v59
    %86 = vmatprep.subr.mxu0 0.0
    %87 = vmatpush1.msra.mxu0 %v60
    %88 = vmatprep.subr.mxu0 0.0
    %89 = vmatpush1.msra.mxu0 %v61
    %90 = vmatprep.subr.mxu0 0.0
    %91 = vmatpush1.msra.mxu0 %v62
    %92 = vmatprep.subr.mxu0 0.0
    %93 = vmatpush1.msra.mxu0 %v63
    %94 = vmatprep.subr.mxu0 0.0
    %95 = vmatpush1.msra.mxu0 %v64
    %96 = vmatprep.subr.mxu0 0.0
    %97 = vmatpush1.msra.mxu0 %v65
    %98 = vmatprep.subr.mxu0 0.0
    %99 = vmatpush1.msra.mxu0 %v66
    %100 = vmatprep.subr.mxu0 0.0
    %101 = vmatpush1.msra.mxu0 %v67
    %102 = vmatprep.subr.mxu0 0.0
    %103 = vmatpush1.msra.mxu0 %v68
    %104 = vmatprep.subr.mxu0 0.0
    %105 = vmatpush1.msra.mxu0 %v69
    %106 = vmatprep.subr.mxu0 0.0
    %107 = vmatpush1.msra.mxu0 %v70
    %108 = vmatprep.subr.mxu0 0.0
    %109 = vmatpush1.msra.mxu0 0.0
    %110 = vmatprep.subr.mxu0 0.0
    %111 = vmatpush1.msra.mxu0 0.0
    %112 = vmatprep.subr.mxu0 0.0
    %113 = vmatpush1.msra.mxu0 0.0
    %114 = vmatprep.subr.mxu0 0.0
    %115 = vmatpush1.msra.mxu0 0.0
    %116 = vmatprep.subr.mxu0 0.0
    %117 = vmatpush1.msra.mxu0 0.0
    %118 = vmatprep.subr.mxu0 0.0
    %119 = vmatpush1.msra.mxu0 0.0
    %120 = vmatprep.subr.mxu0 0.0
    %121 = vmatpush1.msra.mxu0 0.0
    %122 = vmatprep.subr.mxu0 0.0
    %123 = vmatpush1.msra.mxu0 0.0
    %124 = vmatprep.subr.mxu0 0.0
    %125 = vmatpush1.msra.mxu0 0.0
    %126 = vmatprep.subr.mxu0 0.0
    %127 = vmatpush1.msra.mxu0 0.0
    %128 = vmatprep.subr.mxu0 0.0
    %129 = vmatpush1.msra.mxu0 0.0
    %130 = vmatprep.subr.mxu0 0.0
    %131 = vmatpush1.msra.mxu0 0.0
    %132 = vmatprep.subr.mxu0 0.0
    %133 = vmatpush1.msra.mxu0 0.0
    %134 = vmatprep.subr.mxu0 0.0
    %135 = vmatpush1.msra.mxu0 0.0
    %136 = vmatprep.subr.mxu0 0.0
    %137 = vmatpush1.msra.mxu0 0.0
    %138 = vmatprep.subr.mxu0 0.0
    %139 = vmatpush1.msra.mxu0 0.0
    %140 = vmatprep.mubr.f32.mxu0 0.0
    %141 = vmatmul.mubr.f32.gmra.mrb[0].mxu0 %v54
    %v142 = vpop.f32.mrb[0].mxu0
    %v143 = vadd.f32 %v75, %v142
    %v144 = vpop.f32.mrb[0].mxu0
    %145 = vdwg.mxu0
    %v146 = vld [vmem:[#allocation7 + $0x1] sm:$0x1]
    %v147 = vld [vmem:[#allocation7 + $0x2] sm:$0x1]
    %v148 = vmax.f32 %v143, 0.0
    %v149 = vrot.slane %v148, 4
    %v150 = vadd.f32 %v148, %v149
    %v151 = vrot.slane %v150, 2
    %v152 = vadd.f32 %v150, %v151
    %v153 = vrot.slane %v152, 1
    %v154 = vadd.f32 %v152, %v153
    %v155 = vmul.f32 %v154, 0.125
    %v156 = vmul.f32 %v148, %v148
    %v157 = vrot.slane %v156, 4
    %v158 = vadd.f32 %v156, %v157
    %v159 = vrot.slane %v158, 2
    %v160 = vadd.f32 %v158, %v159
    %v161 = vrot.slane %v160, 1
    %v162 = vadd.f32 %v160, %v161
    %v163 = vmul.f32 %v162, 0.125
    %v164 = vmul.f32 %v155, %v155
    %v165 = vsub.f32 %v163, %v164
    %v166 = vadd.f32 %v165, 1e-05
    %v167 = vrsqrt.pop %v166
    %v168 = vmul.f32 %v146, %v167
    %v169 = vmul.f32 %v155, %v168
    %v170 = vsub.f32 %v147, %v169
    %v171 = vlaneseq
    %v172 = vshrl.u32 %v171, 7
    %v173 = vsub.s32 0, %v172
    %v174 = vrot.slane %v168, %v173
    %v175 = vmul.f32 %v148, %v174
    %v176 = vlaneseq
    %v177 = vshrl.u32 %v176, 7
    %v178 = vsub.s32 0, %v177
    %v179 = vrot.slane %v170, %v178
    %v180 = vadd.f32 %v175, %v179
    %s181 = scalar_lea.vmem [#allocation5], 128
    %v182 = vld [vmem:[%s181] sm:$0xff]
    %v183 = vld [vmem:[%s181 + $0x8] sm:$0xff]
    %v184 = vld [vmem:[%s181 + $0x10] sm:$0xff]
    %v185 = vld [vmem:[%s181 + $0x18] sm:$0xff]
    %v186 = vld [vmem:[%s181 + $0x20] sm:$0xff]
    %v187 = vld [vmem:[%s181 + $0x28] sm:$0xff]
    %v188 = vld [vmem:[%s181 + $0x30] sm:$0xff]
    %v189 = vld [vmem:[%s181 + $0x38] sm:$0xff]
    %v190 = vld [vmem:[%s181 + $0x40] sm:$0xff]
    %v191 = vld [vmem:[%s181 + $0x48] sm:$0xff]
    %v192 = vld [vmem:[%s181 + $0x50] sm:$0xff]
    %v193 = vld [vmem:[%s181 + $0x58] sm:$0xff]
    %v194 = vld [vmem:[%s181 + $0x60] sm:$0xff]
    %v195 = vld [vmem:[%s181 + $0x68] sm:$0xff]
    %v196 = vld [vmem:[%s181 + $0x70] sm:$0xff]
    %v197 = vld [vmem:[%s181 + $0x78] sm:$0xff]
    %v198 = vld [vmem:[#allocation7 + $0x3] sm:$0x1]
    %v199 = vlaneseq
    %v200 = vshrl.u32 %v199, 7
    %v201 = vsub.s32 0, %v200
    %v202 = vrot.slane %v198, %v201
    %203 = vmatprep.subr.mxu0 0.0
    %204 = vmatpush1.msra.mxu0 %v182
    %205 = vmatprep.subr.mxu0 0.0
    %206 = vmatpush1.msra.mxu0 %v183
    %207 = vmatprep.subr.mxu0 0.0
    %208 = vmatpush1.msra.mxu0 %v184
    %209 = vmatprep.subr.mxu0 0.0
    %210 = vmatpush1.msra.mxu0 %v185
    %211 = vmatprep.subr.mxu0 0.0
    %212 = vmatpush1.msra.mxu0 %v186
    %213 = vmatprep.subr.mxu0 0.0
    %214 = vmatpush1.msra.mxu0 %v187
    %215 = vmatprep.subr.mxu0 0.0
    %216 = vmatpush1.msra.mxu0 %v188
    %217 = vmatprep.subr.mxu0 0.0
    %218 = vmatpush1.msra.mxu0 %v189
    %219 = vmatprep.subr.mxu0 0.0
    %220 = vmatpush1.msra.mxu0 %v190
    %221 = vmatprep.subr.mxu0 0.0
    %222 = vmatpush1.msra.mxu0 %v191
    %223 = vmatprep.subr.mxu0 0.0
    %224 = vmatpush1.msra.mxu0 %v192
    %225 = vmatprep.subr.mxu0 0.0
    %226 = vmatpush1.msra.mxu0 %v193
    %227 = vmatprep.subr.mxu0 0.0
    %228 = vmatpush1.msra.mxu0 %v194
    %229 = vmatprep.subr.mxu0 0.0
    %230 = vmatpush1.msra.mxu0 %v195
    %231 = vmatprep.subr.mxu0 0.0
    %232 = vmatpush1.msra.mxu0 %v196
    %233 = vmatprep.subr.mxu0 0.0
    %234 = vmatpush1.msra.mxu0 %v197
    %235 = vmatprep.subr.mxu0 0.0
    %236 = vmatpush1.msra.mxu0 0.0
    %237 = vmatprep.subr.mxu0 0.0
    %238 = vmatpush1.msra.mxu0 0.0
    %239 = vmatprep.subr.mxu0 0.0
    %240 = vmatpush1.msra.mxu0 0.0
    %241 = vmatprep.subr.mxu0 0.0
    %242 = vmatpush1.msra.mxu0 0.0
    %243 = vmatprep.subr.mxu0 0.0
    %244 = vmatpush1.msra.mxu0 0.0
    %245 = vmatprep.subr.mxu0 0.0
    %246 = vmatpush1.msra.mxu0 0.0
    %247 = vmatprep.subr.mxu0 0.0
    %248 = vmatpush1.msra.mxu0 0.0
    %249 = vmatprep.subr.mxu0 0.0
    %250 = vmatpush1.msra.mxu0 0.0
    %251 = vmatprep.subr.mxu0 0.0
    %252 = vmatpush1.msra.mxu0 0.0
    %253 = vmatprep.subr.mxu0 0.0
    %254 = vmatpush1.msra.mxu0 0.0
    %255 = vmatprep.subr.mxu0 0.0
    %256 = vmatpush1.msra.mxu0 0.0
    %257 = vmatprep.subr.mxu0 0.0
    %258 = vmatpush1.msra.mxu0 0.0
    %259 = vmatprep.subr.mxu0 0.0
    %260 = vmatpush1.msra.mxu0 0.0
    %261 = vmatprep.subr.mxu0 0.0
    %262 = vmatpush1.msra.mxu0 0.0
    %263 = vmatprep.subr.mxu0 0.0
    %264 = vmatpush1.msra.mxu0 0.0
    %265 = vmatprep.subr.mxu0 0.0
    %266 = vmatpush1.msra.mxu0 0.0
    %267 = vmatprep.mubr.f32.mxu0 0.0
    %268 = vmatmul.mubr.f32.gmra.mrb[0].mxu0 %v180
    %v269 = vpop.f32.mrb[0].mxu0
    %v270 = vadd.f32 %v202, %v269
    %v271 = vpop.f32.mrb[0].mxu0
    %272 = vdwg.mxu0
    %v273 = vld [vmem:[#allocation7 + $0x4] sm:$0x1]
    %v274 = vld [vmem:[#allocation7 + $0x5] sm:$0x1]
    %v275 = vmax.f32 %v270, 0.0
    %v276 = vrot.slane %v275, 4
    %v277 = vadd.f32 %v275, %v276
    %v278 = vrot.slane %v277, 2
    %v279 = vadd.f32 %v277, %v278
    %v280 = vrot.slane %v279, 1
    %v281 = vadd.f32 %v279, %v280
    %v282 = vmul.f32 %v281, 0.125
    %v283 = vmul.f32 %v275, %v275
    %v284 = vrot.slane %v283, 4
    %v285 = vadd.f32 %v283, %v284
    %v286 = vrot.slane %v285, 2
    %v287 = vadd.f32 %v285, %v286
    %v288 = vrot.slane %v287, 1
    %v289 = vadd.f32 %v287, %v288
    %v290 = vmul.f32 %v289, 0.125
    %v291 = vmul.f32 %v282, %v282
    %v292 = vsub.f32 %v290, %v291
    %v293 = vadd.f32 %v292, 1e-05
    %v294 = vrsqrt.pop %v293
    %v295 = vmul.f32 %v273, %v294
    %v296 = vmul.f32 %v282, %v295
    %v297 = vsub.f32 %v274, %v296
    %v298 = vlaneseq
    %v299 = vshrl.u32 %v298, 7
    %v300 = vsub.s32 0, %v299
    %v301 = vrot.slane %v295, %v300
    %v302 = vmul.f32 %v275, %v301
    %v303 = vlaneseq
    %v304 = vshrl.u32 %v303, 7
    %v305 = vsub.s32 0, %v304
    %v306 = vrot.slane %v297, %v305
    %v307 = vadd.f32 %v302, %v306
    %s308 = scalar_lea.vmem [#allocation5], 256
    %v309 = vld [vmem:[%s308] sm:$0xff]
    %v310 = vld [vmem:[%s308 + $0x8] sm:$0xff]
    %v311 = vld [vmem:[%s308 + $0x10] sm:$0xff]
    %v312 = vld [vmem:[%s308 + $0x18] sm:$0xff]
    %v313 = vld [vmem:[%s308 + $0x20] sm:$0xff]
    %v314 = vld [vmem:[%s308 + $0x28] sm:$0xff]
    %v315 = vld [vmem:[%s308 + $0x30] sm:$0xff]
    %v316 = vld [vmem:[%s308 + $0x38] sm:$0xff]
    %v317 = vld [vmem:[%s308 + $0x40] sm:$0xff]
    %v318 = vld [vmem:[%s308 + $0x48] sm:$0xff]
    %v319 = vld [vmem:[%s308 + $0x50] sm:$0xff]
    %v320 = vld [vmem:[%s308 + $0x58] sm:$0xff]
    %v321 = vld [vmem:[%s308 + $0x60] sm:$0xff]
    %v322 = vld [vmem:[%s308 + $0x68] sm:$0xff]
    %v323 = vld [vmem:[%s308 + $0x70] sm:$0xff]
    %v324 = vld [vmem:[%s308 + $0x78] sm:$0xff]
    %v325 = vld [vmem:[#allocation7 + $0x6] sm:$0x1]
    %v326 = vlaneseq
    %v327 = vshrl.u32 %v326, 7
    %v328 = vsub.s32 0, %v327
    %v329 = vrot.slane %v325, %v328
    %330 = vmatprep.subr.mxu0 0.0
    %331 = vmatpush1.msra.mxu0 %v309
    %332 = vmatprep.subr.mxu0 0.0
    %333 = vmatpush1.msra.mxu0 %v310
    %334 = vmatprep.subr.mxu0 0.0
    %335 = vmatpush1.msra.mxu0 %v311
    %336 = vmatprep.subr.mxu0 0.0
    %337 = vmatpush1.msra.mxu0 %v312
    %338 = vmatprep.subr.mxu0 0.0
    %339 = vmatpush1.msra.mxu0 %v313
    %340 = vmatprep.subr.mxu0 0.0
    %341 = vmatpush1.msra.mxu0 %v314
    %342 = vmatprep.subr.mxu0 0.0
    %343 = vmatpush1.msra.mxu0 %v315
    %344 = vmatprep.subr.mxu0 0.0
    %345 = vmatpush1.msra.mxu0 %v316
    %346 = vmatprep.subr.mxu0 0.0
    %347 = vmatpush1.msra.mxu0 %v317
    %348 = vmatprep.subr.mxu0 0.0
    %349 = vmatpush1.msra.mxu0 %v318
    %350 = vmatprep.subr.mxu0 0.0
    %351 = vmatpush1.msra.mxu0 %v319
    %352 = vmatprep.subr.mxu0 0.0
    %353 = vmatpush1.msra.mxu0 %v320
    %354 = vmatprep.subr.mxu0 0.0
    %355 = vmatpush1.msra.mxu0 %v321
    %356 = vmatprep.subr.mxu0 0.0
    %357 = vmatpush1.msra.mxu0 %v322
    %358 = vmatprep.subr.mxu0 0.0
    %359 = vmatpush1.msra.mxu0 %v323
    %360 = vmatprep.subr.mxu0 0.0
    %361 = vmatpush1.msra.mxu0 %v324
    %362 = vmatprep.subr.mxu0 0.0
    %363 = vmatpush1.msra.mxu0 0.0
    %364 = vmatprep.subr.mxu0 0.0
    %365 = vmatpush1.msra.mxu0 0.0
    %366 = vmatprep.subr.mxu0 0.0
    %367 = vmatpush1.msra.mxu0 0.0
    %368 = vmatprep.subr.mxu0 0.0
    %369 = vmatpush1.msra.mxu0 0.0
    %370 = vmatprep.subr.mxu0 0.0
    %371 = vmatpush1.msra.mxu0 0.0
    %372 = vmatprep.subr.mxu0 0.0
    %373 = vmatpush1.msra.mxu0 0.0
    %374 = vmatprep.subr.mxu0 0.0
    %375 = vmatpush1.msra.mxu0 0.0
    %376 = vmatprep.subr.mxu0 0.0
    %377 = vmatpush1.msra.mxu0 0.0
    %378 = vmatprep.subr.mxu0 0.0
    %379 = vmatpush1.msra.mxu0 0.0
    %380 = vmatprep.subr.mxu0 0.0
    %381 = vmatpush1.msra.mxu0 0.0
    %382 = vmatprep.subr.mxu0 0.0
    %383 = vmatpush1.msra.mxu0 0.0
    %384 = vmatprep.subr.mxu0 0.0
    %385 = vmatpush1.msra.mxu0 0.0
    %386 = vmatprep.subr.mxu0 0.0
    %387 = vmatpush1.msra.mxu0 0.0
    %388 = vmatprep.subr.mxu0 0.0
    %389 = vmatpush1.msra.mxu0 0.0
    %390 = vmatprep.subr.mxu0 0.0
    %391 = vmatpush1.msra.mxu0 0.0
    %392 = vmatprep.subr.mxu0 0.0
    %393 = vmatpush1.msra.mxu0 0.0
    %394 = vmatprep.mubr.f32.mxu0 0.0
    %395 = vmatmul.mubr.f32.gmra.mrb[0].mxu0 %v307
    %v396 = vpop.f32.mrb[0].mxu0
    %v397 = vadd.f32 %v329, %v396
    %v398 = vpop.f32.mrb[0].mxu0
    %399 = vdwg.mxu0
    %v400 = vld [vmem:[#allocation7 + $0x7] sm:$0x1]
    %v401 = vld [vmem:[#allocation7 + $0x8] sm:$0x1]
    %v402 = vmax.f32 %v397, 0.0
    %v403 = vrot.slane %v402, 4
    %v404 = vadd.f32 %v402, %v403
    %v405 = vrot.slane %v404, 2
    %v406 = vadd.f32 %v404, %v405
    %v407 = vrot.slane %v406, 1
    %v408 = vadd.f32 %v406, %v407
    %v409 = vmul.f32 %v408, 0.125
    %v410 = vmul.f32 %v402, %v402
    %v411 = vrot.slane %v410, 4
    %v412 = vadd.f32 %v410, %v411
    %v413 = vrot.slane %v412, 2
    %v414 = vadd.f32 %v412, %v413
    %v415 = vrot.slane %v414, 1
    %v416 = vadd.f32 %v414, %v415
    %v417 = vmul.f32 %v416, 0.125
    %v418 = vmul.f32 %v409, %v409
    %v419 = vsub.f32 %v417, %v418
    %v420 = vadd.f32 %v419, 1e-05
    %v421 = vrsqrt.pop %v420
    %v422 = vmul.f32 %v400, %v421
    %v423 = vmul.f32 %v409, %v422
    %v424 = vsub.f32 %v401, %v423
    %v425 = vlaneseq
    %v426 = vshrl.u32 %v425, 7
    %v427 = vsub.s32 0, %v426
    %v428 = vrot.slane %v422, %v427
    %v429 = vmul.f32 %v402, %v428
    %v430 = vlaneseq
    %v431 = vshrl.u32 %v430, 7
    %v432 = vsub.s32 0, %v431
    %v433 = vrot.slane %v424, %v432
    %v434 = vadd.f32 %v429, %v433
    %s435 = scalar_lea.vmem [#allocation5], 384
    %v436 = vld [vmem:[%s435] sm:$0xff]
    %v437 = vld [vmem:[%s435 + $0x8] sm:$0xff]
    %v438 = vld [vmem:[%s435 + $0x10] sm:$0xff]
    %v439 = vld [vmem:[%s435 + $0x18] sm:$0xff]
    %v440 = vld [vmem:[%s435 + $0x20] sm:$0xff]
    %v441 = vld [vmem:[%s435 + $0x28] sm:$0xff]
    %v442 = vld [vmem:[%s435 + $0x30] sm:$0xff]
    %v443 = vld [vmem:[%s435 + $0x38] sm:$0xff]
    %v444 = vld [vmem:[%s435 + $0x40] sm:$0xff]
    %v445 = vld [vmem:[%s435 + $0x48] sm:$0xff]
    %v446 = vld [vmem:[%s435 + $0x50] sm:$0xff]
    %v447 = vld [vmem:[%s435 + $0x58] sm:$0xff]
    %v448 = vld [vmem:[%s435 + $0x60] sm:$0xff]
    %v449 = vld [vmem:[%s435 + $0x68] sm:$0xff]
    %v450 = vld [vmem:[%s435 + $0x70] sm:$0xff]
    %v451 = vld [vmem:[%s435 + $0x78] sm:$0xff]
    %v452 = vld [vmem:[#allocation7 + $0x9] sm:$0x1]
    %v453 = vlaneseq
    %v454 = vshrl.u32 %v453, 7
    %v455 = vsub.s32 0, %v454
    %v456 = vrot.slane %v452, %v455
    %457 = vmatprep.subr.mxu0 0.0
    %458 = vmatpush1.msra.mxu0 %v436
    %459 = vmatprep.subr.mxu0 0.0
    %460 = vmatpush1.msra.mxu0 %v437
    %461 = vmatprep.subr.mxu0 0.0
    %462 = vmatpush1.msra.mxu0 %v438
    %463 = vmatprep.subr.mxu0 0.0
    %464 = vmatpush1.msra.mxu0 %v439
    %465 = vmatprep.subr.mxu0 0.0
    %466 = vmatpush1.msra.mxu0 %v440
    %467 = vmatprep.subr.mxu0 0.0
    %468 = vmatpush1.msra.mxu0 %v441
    %469 = vmatprep.subr.mxu0 0.0
    %470 = vmatpush1.msra.mxu0 %v442
    %471 = vmatprep.subr.mxu0 0.0
    %472 = vmatpush1.msra.mxu0 %v443
    %473 = vmatprep.subr.mxu0 0.0
    %474 = vmatpush1.msra.mxu0 %v444
    %475 = vmatprep.subr.mxu0 0.0
    %476 = vmatpush1.msra.mxu0 %v445
    %477 = vmatprep.subr.mxu0 0.0
    %478 = vmatpush1.msra.mxu0 %v446
    %479 = vmatprep.subr.mxu0 0.0
    %480 = vmatpush1.msra.mxu0 %v447
    %481 = vmatprep.subr.mxu0 0.0
    %482 = vmatpush1.msra.mxu0 %v448
    %483 = vmatprep.subr.mxu0 0.0
    %484 = vmatpush1.msra.mxu0 %v449
    %485 = vmatprep.subr.mxu0 0.0
    %486 = vmatpush1.msra.mxu0 %v450
    %487 = vmatprep.subr.mxu0 0.0
    %488 = vmatpush1.msra.mxu0 %v451
    %489 = vmatprep.subr.mxu0 0.0
    %490 = vmatpush1.msra.mxu0 0.0
    %491 = vmatprep.subr.mxu0 0.0
    %492 = vmatpush1.msra.mxu0 0.0
    %493 = vmatprep.subr.mxu0 0.0
    %494 = vmatpush1.msra.mxu0 0.0
    %495 = vmatprep.subr.mxu0 0.0
    %496 = vmatpush1.msra.mxu0 0.0
    %497 = vmatprep.subr.mxu0 0.0
    %498 = vmatpush1.msra.mxu0 0.0
    %499 = vmatprep.subr.mxu0 0.0
    %500 = vmatpush1.msra.mxu0 0.0
    %501 = vmatprep.subr.mxu0 0.0
    %502 = vmatpush1.msra.mxu0 0.0
    %503 = vmatprep.subr.mxu0 0.0
    %504 = vmatpush1.msra.mxu0 0.0
    %505 = vmatprep.subr.mxu0 0.0
    %506 = vmatpush1.msra.mxu0 0.0
    %507 = vmatprep.subr.mxu0 0.0
    %508 = vmatpush1.msra.mxu0 0.0
    %509 = vmatprep.subr.mxu0 0.0
    %510 = vmatpush1.msra.mxu0 0.0
    %511 = vmatprep.subr.mxu0 0.0
    %512 = vmatpush1.msra.mxu0 0.0
    %513 = vmatprep.subr.mxu0 0.0
    %514 = vmatpush1.msra.mxu0 0.0
    %515 = vmatprep.subr.mxu0 0.0
    %516 = vmatpush1.msra.mxu0 0.0
    %517 = vmatprep.subr.mxu0 0.0
    %518 = vmatpush1.msra.mxu0 0.0
    %519 = vmatprep.subr.mxu0 0.0
    %520 = vmatpush1.msra.mxu0 0.0
    %521 = vmatprep.mubr.f32.mxu0 0.0
    %522 = vmatmul.mubr.f32.gmra.mrb[0].mxu0 %v434
    %v523 = vpop.f32.mrb[0].mxu0
    %v524 = vadd.f32 %v456, %v523
    %v525 = vpop.f32.mrb[0].mxu0
    %526 = vdwg.mxu0
    %527 = vst [vmem:[#allocation8] sm:$0xff] %v524
    // Predicated region
    $region26: #{tpu_custom_call.1} parent=1 // pred_check
      _
    $region27: #{tpu_custom_call.1} parent=1 // pred_check_branch
      %529 = sbr.rel (0) target = $region29
    $region28: #{tpu_custom_call.1} parent=1 // pred_region
      %s531 = ssub.s32 128, 128
      %532 = vsyncadd [#allocation4], %s531
      %s534 = sshll.u32 [#allocation8], 4
      %s535 = int_to_ptr.vmem [resolvable:$true] %s534
      %537 = dma.vmem_to_hbm [thread:$0]  %s535, 128, %s3, [#allocation4]
    $region29: #{tpu_custom_call.1} parent=1 // pred_fallthru
      _
    // Predicated region
    $region30: #{tpu_custom_call.1} parent=1 // pred_check
      _
    $region31: #{tpu_custom_call.1} parent=1 // pred_check_branch
      %539 = sbr.rel (0) target = $region33
    $region32: #{tpu_custom_call.1} parent=1 // pred_region
      %540 = dma.done [#allocation4], 128
    $region33: #{tpu_custom_call.1} parent=1 // pred_fallthru
      _
    %541 = vsyncpa [#allocation3], 1
    %542 = vsyncpa [#allocation6], 1
    %543 = vsyncpa [#allocation4], 1

</llo_original>
